<compile_context>
chip_gen: v6e
topology: v6e:2x2x1
jax: 0.10.0
libtpu: 0.0.40
codegen_flags: <defaults>
</compile_context>

<pallas_src>
import functools

import jax
import jax.numpy as jnp
from jax.experimental import pallas as pl
from jax.experimental.pallas import tpu as pltpu  # noqa: F401  (TPU backend / memory spaces)

LANE = 128
_EPS = 1e-5


def _round_up(n, m):
    return ((n + m - 1) // m) * m


# ---------------------------------------------------------------------------
# Fused kernel: whole MLP in one pallas_call
# ---------------------------------------------------------------------------
def _make_fused_kernel(n_hidden, eps):
    """Kernel ref layout:
       x_ref,
       w0, b0,                        (layer 0: Linear + ReLU)
       [w_i, gamma_i, beta_i] * (n_hidden-1),   (Linear + BN + ReLU; bias dropped)
       w_last, b_last,                (final Linear)
       out_ref
    """

    def kernel(*refs):
        x_ref = refs[0]
        out_ref = refs[-1]
        p = refs[1:-1]

        h = x_ref[...]
        i = 0

        # ----- layer 0: Linear + bias + ReLU -----
        w, b = p[i][...], p[i + 1][...]
        i += 2
        h = jnp.dot(h, w, preferred_element_type=jnp.float32) + b
        h = jnp.maximum(h, 0.0)

        # ----- hidden layers: Linear + BatchNorm(train) + ReLU -----
        for _ in range(n_hidden - 1):
            w, g, beta = p[i][...], p[i + 1][...], p[i + 2][...]
            i += 3
            y = jnp.dot(h, w, preferred_element_type=jnp.float32)
            # bias intentionally omitted: cancelled exactly by mean subtraction
            mean = jnp.mean(y, axis=0, keepdims=True)
            var = jnp.mean(jnp.square(y - mean), axis=0, keepdims=True)  # biased var
            y = (y - mean) * jax.lax.rsqrt(var + eps)
            h = jnp.maximum(y * g + beta, 0.0)

        # ----- final Linear -----
        w, b = p[i][...], p[i + 1][...]
        out_ref[...] = (jnp.dot(h, w, preferred_element_type=jnp.float32) + b).astype(
            out_ref.dtype
        )

    return kernel


def _full_spec(shape):
    # gridless call: one block == full array
    return pl.BlockSpec(shape, lambda: tuple(0 for _ in shape))


# ---------------------------------------------------------------------------
# Parameters: PyTorch-style init + one-time "prepare" (transpose + lane-pad)
# ---------------------------------------------------------------------------
def init_gen_params(key, ninput, noutput, layer_sizes, init_std=0.02):
    """Mirrors Gen.__init__ + Gen.init_weights:
       weights ~ N(0, 0.02), biases = 0, BN gamma ~ N(0, 0.02), BN beta = 0."""
    params = []
    inp = ninput
    for idx, ls in enumerate(layer_sizes):
        key, kw = jax.random.split(key)
        w = jax.random.normal(kw, (ls, inp), jnp.float32) * init_std  # (out, in)
        b = jnp.zeros((ls,), jnp.float32)
        if idx > 0:
            key, kg = jax.random.split(key)
            gamma = jax.random.normal(kg, (ls,), jnp.float32) * init_std
            beta = jnp.zeros((ls,), jnp.float32)
            params.append(dict(w=w, b=b, gamma=gamma, beta=beta))
        else:
            params.append(dict(w=w, b=b))
        inp = ls
    key, kw = jax.random.split(key)
    w_last = jax.random.normal(kw, (noutput, inp), jnp.float32) * init_std
    b_last = jnp.zeros((noutput,), jnp.float32)
    params.append(dict(w=w_last, b=b_last))
    return params


def prepare_params(params):
    """One-time: transpose weights to (in, out) and zero-pad all feature
    (lane) dims to multiples of 128.  The input-feature dim of layer 0 stays
    unpadded (x is passed unpadded); every later in-dim equals the previous
    (padded) out-dim so the chain stays consistent."""
    flat = []
    n_layers = len(params)
    prev_pad = params[0]["w"].shape[1]  # layer-0 in-features (unpadded)
    for idx, prm in enumerate(params):
        out_f, in_f = prm["w"].shape
        out_pad = _round_up(out_f, LANE)
        w_t = jnp.zeros((prev_pad, out_pad), jnp.float32)
        w_t = w_t.at[:in_f, :out_f].set(prm["w"].T)

        def pad_vec(v):
            return jnp.zeros((1, out_pad), jnp.float32).at[0, :out_f].set(v)

        if idx == 0 or idx == n_layers - 1:
            flat.extend([w_t, pad_vec(prm["b"])])
        else:
            # BN layer: bias dropped (cancelled by BN mean subtraction)
            flat.extend([w_t, pad_vec(prm["gamma"]), pad_vec(prm["beta"])])
        prev_pad = out_pad
    return tuple(flat), prev_pad  # prev_pad == padded output width


# ---------------------------------------------------------------------------
# Forward
# ---------------------------------------------------------------------------
def _gen_forward_padded(flat_params, x, *, n_hidden, out_pad, eps=_EPS):
    B = x.shape[0]
    kernel = _make_fused_kernel(n_hidden, eps)
    in_specs = [_full_spec(x.shape)] + [_full_spec(p.shape) for p in flat_params]
    return pl.pallas_call(
        kernel,
        out_shape=jax.ShapeDtypeStruct((B, out_pad), jnp.float32),
        in_specs=in_specs,
        out_specs=_full_spec((B, out_pad)),
    )(x, *flat_params)


def make_gen_forward(n_hidden, noutput, out_pad):
    """Returns a jitted forward: (flat_params, x) -> (B, noutput)."""

    @jax.jit
    def fwd(flat_params, x):
        y = _gen_forward_padded(flat_params, x, n_hidden=n_hidden, out_pad=out_pad)
        return y[:, :noutput]

    return fwd


# ---------------------------------------------------------------------------
# Pure-JAX reference (mirrors PyTorch exactly, incl. bias before BN)
# ---------------------------------------------------------------------------
def gen_forward_reference(params, x):
    h = x
    n_hidden = len(params) - 1
    for idx in range(n_hidden):
        p = params[idx]
        h = h @ p["w"].T + p["b"]
        if "gamma" in p:
            mean = jnp.mean(h, axis=0, keepdims=True)
            var = jnp.mean(jnp.square(h - mean), axis=0, keepdims=True)
            h = (h - mean) * jax.lax.rsqrt(var + _EPS) * p["gamma"] + p["beta"]
        h = jnp.maximum(h, 0.0)
    p = params[-1]
    return h @ p["w"].T + p["b"]


# ---------------------------------------------------------------------------
if __name__ == "__main__":
    key = jax.random.PRNGKey(0)

    # Small shapes consistent with the module: z_size=32, arch_g="64-64", nhidden=32
    batch, ninput, noutput = 8, 32, 32
    layer_sizes = (64, 64)

    key, kp, kx = jax.random.split(key, 3)
    params = init_gen_params(kp, ninput, noutput, layer_sizes)
    x = jax.random.normal(kx, (batch, ninput), jnp.float32)

    flat_params, out_pad = prepare_params(params)      # one-time transpose + pad
    fwd = make_gen_forward(len(layer_sizes), noutput, out_pad)

    out = fwd(flat_params, x)
    out = jax.block_until_ready(out)

    ref = gen_forward_reference(params, x)
    assert out.shape == (batch, noutput), out.shape
    assert jnp.allclose(out, ref, atol=1e-4, rtol=1e-4), float(
        jnp.max(jnp.abs(out - ref))
    )
    print("KERNEL_OK")
</pallas_src>

<mosaic_0001>
module attributes {stable_mosaic.version = 11 : i64} {
  func.func @kernel(%arg0: memref<8x32xf32, #tpu.memory_space<vmem>>, %arg1: memref<32x128xf32, #tpu.memory_space<vmem>>, %arg2: memref<1x128xf32, #tpu.memory_space<vmem>>, %arg3: memref<128x128xf32, #tpu.memory_space<vmem>>, %arg4: memref<1x128xf32, #tpu.memory_space<vmem>>, %arg5: memref<1x128xf32, #tpu.memory_space<vmem>>, %arg6: memref<128x128xf32, #tpu.memory_space<vmem>>, %arg7: memref<1x128xf32, #tpu.memory_space<vmem>>, %arg8: memref<8x128xf32, #tpu.memory_space<vmem>>) attributes {dimension_semantics = [], scalar_prefetch = 0 : i64, scratch_operands = 0 : i64, tpu.core_type = #tpu.core_type<tc>} {
    %c0 = arith.constant 0 : index
    %c0_0 = arith.constant 0 : index
    %0 = vector.load %arg0[%c0, %c0_0] : memref<8x32xf32, #tpu.memory_space<vmem>>, vector<8x32xf32>
    %c0_1 = arith.constant 0 : index
    %c0_2 = arith.constant 0 : index
    %1 = vector.load %arg1[%c0_1, %c0_2] : memref<32x128xf32, #tpu.memory_space<vmem>>, vector<32x128xf32>
    %c0_3 = arith.constant 0 : index
    %c0_4 = arith.constant 0 : index
    %2 = vector.load %arg2[%c0_3, %c0_4] : memref<1x128xf32, #tpu.memory_space<vmem>>, vector<1x128xf32>
    %cst = arith.constant dense<0.000000e+00> : vector<8x128xf32>
    %3 = tpu.matmul %0, %1, %cst {dimension_numbers = #tpu.dot_dimension_numbers<[1], [0], [0], [1], [0, 0, 1, 1], [], []>} : vector<8x32xf32>, vector<32x128xf32>, vector<8x128xf32> -> vector<8x128xf32>
    %4 = vector.broadcast %2 : vector<1x128xf32> to vector<8x128xf32>
    %5 = arith.addf %3, %4 : vector<8x128xf32>
    %cst_5 = arith.constant 0.000000e+00 : f32
    %6 = vector.broadcast %cst_5 : f32 to vector<8x128xf32>
    %7 = arith.maximumf %5, %6 : vector<8x128xf32>
    %c0_6 = arith.constant 0 : index
    %c0_7 = arith.constant 0 : index
    %8 = vector.load %arg3[%c0_6, %c0_7] : memref<128x128xf32, #tpu.memory_space<vmem>>, vector<128x128xf32>
    %c0_8 = arith.constant 0 : index
    %c0_9 = arith.constant 0 : index
    %9 = vector.load %arg4[%c0_8, %c0_9] : memref<1x128xf32, #tpu.memory_space<vmem>>, vector<1x128xf32>
    %c0_10 = arith.constant 0 : index
    %c0_11 = arith.constant 0 : index
    %10 = vector.load %arg5[%c0_10, %c0_11] : memref<1x128xf32, #tpu.memory_space<vmem>>, vector<1x128xf32>
    %cst_12 = arith.constant dense<0.000000e+00> : vector<8x128xf32>
    %11 = tpu.matmul %7, %8, %cst_12 {dimension_numbers = #tpu.dot_dimension_numbers<[1], [0], [0], [1], [0, 0, 1, 1], [], []>} : vector<8x128xf32>, vector<128x128xf32>, vector<8x128xf32> -> vector<8x128xf32>
    %cst_13 = arith.constant dense<0.000000e+00> : vector<128xf32>
    %12 = vector.multi_reduction <add>, %11, %cst_13 [0] : vector<8x128xf32> to vector<128xf32>
    %13 = vector.shape_cast %12 : vector<128xf32> to vector<1x128xf32>
    %cst_14 = arith.constant 8.000000e+00 : f32
    %14 = vector.broadcast %cst_14 : f32 to vector<1x128xf32>
    %15 = arith.divf %13, %14 : vector<1x128xf32>
    %16 = vector.broadcast %15 : vector<1x128xf32> to vector<8x128xf32>
    %17 = arith.subf %11, %16 : vector<8x128xf32>
    %18 = arith.mulf %17, %17 : vector<8x128xf32>
    %cst_15 = arith.constant dense<0.000000e+00> : vector<128xf32>
    %19 = vector.multi_reduction <add>, %18, %cst_15 [0] : vector<8x128xf32> to vector<128xf32>
    %20 = vector.shape_cast %19 : vector<128xf32> to vector<1x128xf32>
    %cst_16 = arith.constant 8.000000e+00 : f32
    %21 = vector.broadcast %cst_16 : f32 to vector<1x128xf32>
    %22 = arith.divf %20, %21 : vector<1x128xf32>
    %23 = vector.broadcast %15 : vector<1x128xf32> to vector<8x128xf32>
    %24 = arith.subf %11, %23 : vector<8x128xf32>
    %cst_17 = arith.constant 9.99999974E-6 : f32
    %25 = vector.broadcast %cst_17 : f32 to vector<1x128xf32>
    %26 = arith.addf %22, %25 : vector<1x128xf32>
    %27 = math.rsqrt %26 : vector<1x128xf32>
    %28 = vector.broadcast %27 : vector<1x128xf32> to vector<8x128xf32>
    %29 = arith.mulf %24, %28 : vector<8x128xf32>
    %30 = vector.broadcast %9 : vector<1x128xf32> to vector<8x128xf32>
    %31 = arith.mulf %29, %30 : vector<8x128xf32>
    %32 = vector.broadcast %10 : vector<1x128xf32> to vector<8x128xf32>
    %33 = arith.addf %31, %32 : vector<8x128xf32>
    %cst_18 = arith.constant 0.000000e+00 : f32
    %34 = vector.broadcast %cst_18 : f32 to vector<8x128xf32>
    %35 = arith.maximumf %33, %34 : vector<8x128xf32>
    %c0_19 = arith.constant 0 : index
    %c0_20 = arith.constant 0 : index
    %36 = vector.load %arg6[%c0_19, %c0_20] : memref<128x128xf32, #tpu.memory_space<vmem>>, vector<128x128xf32>
    %c0_21 = arith.constant 0 : index
    %c0_22 = arith.constant 0 : index
    %37 = vector.load %arg7[%c0_21, %c0_22] : memref<1x128xf32, #tpu.memory_space<vmem>>, vector<1x128xf32>
    %cst_23 = arith.constant dense<0.000000e+00> : vector<8x128xf32>
    %38 = tpu.matmul %35, %36, %cst_23 {dimension_numbers = #tpu.dot_dimension_numbers<[1], [0], [0], [1], [0, 0, 1, 1], [], []>} : vector<8x128xf32>, vector<128x128xf32>, vector<8x128xf32> -> vector<8x128xf32>
    %39 = vector.broadcast %37 : vector<1x128xf32> to vector<8x128xf32>
    %40 = arith.addf %38, %39 : vector<8x128xf32>
    %c0_24 = arith.constant 0 : index
    %c0_25 = arith.constant 0 : index
    %41 = vector.load %arg8[%c0_24, %c0_25] : memref<8x128xf32, #tpu.memory_space<vmem>>, vector<8x128xf32>
    tpu.vector_store %arg8[%c0_24, %c0_25], %40 {strides = array<i32>} : memref<8x128xf32, #tpu.memory_space<vmem>>, vector<8x128xf32>,
    return
  }
}

</mosaic_0001>

<llo_original>
// kernel: fwd.1
$region0: #{fwd.1}
  #allocation0 [shape = 'u32[]', space=smem, size = 0x4, offset = 0x4, fixed_abs, tag = 'smem constant byte address 0x4 - core index']
  #allocation1 [shape = 'u32[144,128]{1,0:T(1,128)}', space=vmem, size = 0x12000, scoped, tag = 'internal scratch']
  %s0 = inlined_call_operand.vmem [shape: f32[8,32], index: 0, kind: input, shape index: {}]
  %s1 = inlined_call_operand.hbm [shape: f32[32,128], index: 1, kind: input, shape index: {}]
  %s2 = inlined_call_operand.vmem [shape: f32[1,128], index: 2, kind: input, shape index: {}]
  %s3 = inlined_call_operand.hbm [shape: f32[128,128], index: 3, kind: input, shape index: {}]
  %s4 = inlined_call_operand.vmem [shape: f32[1,128], index: 4, kind: input, shape index: {}]
  %s5 = inlined_call_operand.vmem [shape: f32[1,128], index: 5, kind: input, shape index: {}]
  %s6 = inlined_call_operand.hbm [shape: f32[128,128], index: 6, kind: input, shape index: {}]
  %s7 = inlined_call_operand.vmem [shape: f32[1,128], index: 7, kind: input, shape index: {}]
  %s8 = inlined_call_operand.hbm [shape: f32[8,128], index: 8, kind: output, shape index: {}]
  %s9 = sld [smem:[#allocation0]]
  $region54: #{fwd.1} parent=0
    _
  %s11 = ssub.s32 1, %s9
  %s12 = scalar_select 0, %s11, %s9
  $region1: #{fwd.1} parent=0
    #allocation2 [shape = 'u8[16384]{0}', space=vmem, size = 0x4000, scoped, tag = 'input window, operand 1, single buffered']
    #allocation3 [shape = 's32[1]{0}', space=sflag, size = 0x4, scoped, tag = 'scoped memory for fwd.1']
    #allocation4 [shape = 's32[1]{0}', space=sflag, size = 0x4, scoped, tag = 'scoped memory for fwd.1']
    #allocation5 [shape = 'u8[65536]{0}', space=vmem, size = 0x10000, scoped, tag = 'input window, operand 3, single buffered']
    #allocation6 [shape = 's32[1]{0}', space=sflag, size = 0x4, scoped, tag = 'scoped memory for fwd.1']
    #allocation7 [shape = 'u8[65536]{0}', space=vmem, size = 0x10000, scoped, tag = 'input window, operand 6, single buffered']
    #allocation8 [shape = 'u8[4096]{0}', space=vmem, size = 0x1000, scoped, tag = 'output window, operand 0, single buffered']
    %13 = vsyncpa [#allocation3], 0
    %14 = vsyncpa [#allocation6], 0
    %15 = vsyncpa [#allocation4], 0
    // Predicated region
    $region2: #{fwd.1} parent=1 // pred_check
      _
    $region3: #{fwd.1} parent=1 // pred_check_branch
      %17 = sbr.rel (0) target = $region5
    $region4: #{fwd.1} parent=1 // pred_region
      _
    $region5: #{fwd.1} parent=1 // pred_fallthru
      _
    // Predicated region
    $region6: #{fwd.1} parent=1 // pred_check
      _
    $region7: #{fwd.1} parent=1 // pred_check_branch
      %19 = sbr.rel (0) target = $region9
    $region8: #{fwd.1} parent=1 // pred_region
      %s21 = ssub.s32 512, 512
      %22 = vsyncadd [#allocation3], %s21
      %s23 = sshll.u32 [#allocation2], 4
      %s24 = int_to_ptr.vmem [resolvable:$true] %s23
      %29 = dma.hbm_to_vmem [thread:$0]  %s1, 512, %s24, [#allocation3], 128, 128, 8
    $region9: #{fwd.1} parent=1 // pred_fallthru
      _
    // Predicated region
    $region10: #{fwd.1} parent=1 // pred_check
      _
    $region11: #{fwd.1} parent=1 // pred_check_branch
      %31 = sbr.rel (0) target = $region13
    $region12: #{fwd.1} parent=1 // pred_region
      _
    $region13: #{fwd.1} parent=1 // pred_fallthru
      _
    // Predicated region
    $region14: #{fwd.1} parent=1 // pred_check
      _
    $region15: #{fwd.1} parent=1 // pred_check_branch
      %33 = sbr.rel (0) target = $region17
    $region16: #{fwd.1} parent=1 // pred_region
      %s35 = ssub.s32 2048, 2048
      %36 = vsyncadd [#allocation6], %s35
      %s37 = sshll.u32 [#allocation5], 4
      %s38 = int_to_ptr.vmem [resolvable:$true] %s37
      %43 = dma.hbm_to_vmem [thread:$0]  %s3, 2048, %s38, [#allocation6], 128, 128, 8
    $region17: #{fwd.1} parent=1 // pred_fallthru
      _
    // Predicated region
    $region18: #{fwd.1} parent=1 // pred_check
      _
    $region19: #{fwd.1} parent=1 // pred_check_branch
      %45 = sbr.rel (0) target = $region21
    $region20: #{fwd.1} parent=1 // pred_region
      _
    $region21: #{fwd.1} parent=1 // pred_fallthru
      _
    // Predicated region
    $region22: #{fwd.1} parent=1 // pred_check
      _
    $region23: #{fwd.1} parent=1 // pred_check_branch
      %47 = sbr.rel (0) target = $region25
    $region24: #{fwd.1} parent=1 // pred_region
      _
    $region25: #{fwd.1} parent=1 // pred_fallthru
      _
    // Predicated region
    $region26: #{fwd.1} parent=1 // pred_check
      _
    $region27: #{fwd.1} parent=1 // pred_check_branch
      %49 = sbr.rel (0) target = $region29
    $region28: #{fwd.1} parent=1 // pred_region
      %s51 = ssub.s32 2048, 2048
      %52 = vsyncadd [#allocation6], %s51
      %s53 = sshll.u32 [#allocation7], 4
      %s54 = int_to_ptr.vmem [resolvable:$true] %s53
      %59 = dma.hbm_to_vmem [thread:$0]  %s6, 2048, %s54, [#allocation6], 128, 128, 8
    $region29: #{fwd.1} parent=1 // pred_fallthru
      _
    // Predicated region
    $region30: #{fwd.1} parent=1 // pred_check
      _
    $region31: #{fwd.1} parent=1 // pred_check_branch
      %61 = sbr.rel (0) target = $region33
    $region32: #{fwd.1} parent=1 // pred_region
      _
    $region33: #{fwd.1} parent=1 // pred_fallthru
      _
    // Predicated region
    $region34: #{fwd.1} parent=1 // pred_check
      _
    $region35: #{fwd.1} parent=1 // pred_check_branch
      %63 = sbr.rel (0) target = $region37
    $region36: #{fwd.1} parent=1 // pred_region
      %64 = dma.done [#allocation3], 512
    $region37: #{fwd.1} parent=1 // pred_fallthru
      _
    // Predicated region
    $region38: #{fwd.1} parent=1 // pred_check
      _
    $region39: #{fwd.1} parent=1 // pred_check_branch
      %66 = sbr.rel (0) target = $region41
    $region40: #{fwd.1} parent=1 // pred_region
      %67 = dma.done [#allocation6], 2048
    $region41: #{fwd.1} parent=1 // pred_fallthru
      _
    // Predicated region
    $region42: #{fwd.1} parent=1 // pred_check
      _
    $region43: #{fwd.1} parent=1 // pred_check_branch
      %69 = sbr.rel (0) target = $region45
    $region44: #{fwd.1} parent=1 // pred_region
      %70 = dma.done [#allocation6], 2048
    $region45: #{fwd.1} parent=1 // pred_fallthru
      _
    %v71 = vld [vmem:[%s0] sm:$0xff]
    %v72 = vld [vmem:[#allocation2] sm:$0xff]
    %v73 = vld [vmem:[#allocation2 + $0x8] sm:$0xff]
    %v74 = vld [vmem:[#allocation2 + $0x10] sm:$0xff]
    %v75 = vld [vmem:[#allocation2 + $0x18] sm:$0xff]
    %v76 = vld [vmem:[%s2] sm:$0x1]
    %v78 = vlaneseq
    %v79 = vshrl.u32 %v78, 7
    %v80 = vsub.s32 0, %v79
    %v81 = vrot.slane %v76, %v80
    %vm83 = vcmask 261120
    %v85 = vsel %vm83, %v71, 0
    %87 = vmatprep.subr.mxu0 0.0
    %88 = vmatpush1.msra.mxu0 0.0
    %89 = vmatprep.subr.mxu0 0.0
    %90 = vmatpush1.msra.mxu0 0.0
    %91 = vmatprep.subr.mxu0 0.0
    %92 = vmatpush1.msra.mxu0 0.0
    %93 = vmatprep.subr.mxu0 0.0
    %94 = vmatpush1.msra.mxu0 0.0
    %95 = vmatprep.subr.mxu0 0.0
    %96 = vmatpush1.msra.mxu0 0.0
    %97 = vmatprep.subr.mxu0 0.0
    %98 = vmatpush1.msra.mxu0 0.0
    %99 = vmatprep.subr.mxu0 0.0
    %100 = vmatpush1.msra.mxu0 0.0
    %101 = vmatprep.subr.mxu0 0.0
    %102 = vmatpush1.msra.mxu0 0.0
    %103 = vmatprep.subr.mxu0 0.0
    %104 = vmatpush1.msra.mxu0 0.0
    %105 = vmatprep.subr.mxu0 0.0
    %106 = vmatpush1.msra.mxu0 0.0
    %107 = vmatprep.subr.mxu0 0.0
    %108 = vmatpush1.msra.mxu0 0.0
    %109 = vmatprep.subr.mxu0 0.0
    %110 = vmatpush1.msra.mxu0 0.0
    %111 = vmatprep.subr.mxu0 0.0
    %112 = vmatpush1.msra.mxu0 %v75
    %113 = vmatprep.subr.mxu0 0.0
    %114 = vmatpush1.msra.mxu0 %v74
    %115 = vmatprep.subr.mxu0 0.0
    %116 = vmatpush1.msra.mxu0 %v73
    %117 = vmatprep.subr.mxu0 0.0
    %118 = vmatpush1.msra.mxu0 %v72
    %119 = vmatprep.subr.mxu0 0.0
    %120 = vmatpush2.msra.mxu0 0.0
    %121 = vmatprep.subr.mxu0 0.0
    %122 = vmatpush2.msra.mxu0 0.0
    %123 = vmatprep.subr.mxu0 0.0
    %124 = vmatpush2.msra.mxu0 0.0
    %125 = vmatprep.subr.mxu0 0.0
    %126 = vmatpush2.msra.mxu0 0.0
    %127 = vmatprep.subr.mxu0 0.0
    %128 = vmatpush2.msra.mxu0 0.0
    %129 = vmatprep.subr.mxu0 0.0
    %130 = vmatpush2.msra.mxu0 0.0
    %131 = vmatprep.subr.mxu0 0.0
    %132 = vmatpush2.msra.mxu0 0.0
    %133 = vmatprep.subr.mxu0 0.0
    %134 = vmatpush2.msra.mxu0 0.0
    %135 = vmatprep.subr.mxu0 0.0
    %136 = vmatpush2.msra.mxu0 0.0
    %137 = vmatprep.subr.mxu0 0.0
    %138 = vmatpush2.msra.mxu0 0.0
    %139 = vmatprep.subr.mxu0 0.0
    %140 = vmatpush2.msra.mxu0 0.0
    %141 = vmatprep.subr.mxu0 0.0
    %142 = vmatpush2.msra.mxu0 0.0
    %143 = vmatprep.subr.mxu0 0.0
    %144 = vmatpush2.msra.mxu0 0.0
    %145 = vmatprep.subr.mxu0 0.0
    %146 = vmatpush2.msra.mxu0 0.0
    %147 = vmatprep.subr.mxu0 0.0
    %148 = vmatpush2.msra.mxu0 0.0
    %149 = vmatprep.subr.mxu0 0.0
    %150 = vmatpush2.msra.mxu0 0.0
    %151 = vmatprep.mubr.f32.mxu0 0.0
    %152 = vmatmul.mubr.f32.gmra.mxu0 %v85
    %v153 = vpop.f32.mrf.mxu0
    %v154 = vadd.f32 %v81, %v153
    %v155 = vpop.f32.mrf.mxu0
    %156 = vdwg.mxu0
    %v157 = vmax.f32 %v154, 0.0
    %v158 = vld [vmem:[#allocation5] sm:$0xff]
    %v159 = vld [vmem:[#allocation5 + $0x8] sm:$0xff]
    %v160 = vld [vmem:[#allocation5 + $0x10] sm:$0xff]
    %v161 = vld [vmem:[#allocation5 + $0x18] sm:$0xff]
    %v162 = vld [vmem:[#allocation5 + $0x20] sm:$0xff]
    %v163 = vld [vmem:[#allocation5 + $0x28] sm:$0xff]
    %v164 = vld [vmem:[#allocation5 + $0x30] sm:$0xff]
    %v165 = vld [vmem:[#allocation5 + $0x38] sm:$0xff]
    %v166 = vld [vmem:[#allocation5 + $0x40] sm:$0xff]
    %v167 = vld [vmem:[#allocation5 + $0x48] sm:$0xff]
    %v168 = vld [vmem:[#allocation5 + $0x50] sm:$0xff]
    %v169 = vld [vmem:[#allocation5 + $0x58] sm:$0xff]
    %v170 = vld [vmem:[#allocation5 + $0x60] sm:$0xff]
    %v171 = vld [vmem:[#allocation5 + $0x68] sm:$0xff]
    %v172 = vld [vmem:[#allocation5 + $0x70] sm:$0xff]
    %v173 = vld [vmem:[#allocation5 + $0x78] sm:$0xff]
    %v174 = vld [vmem:[%s4] sm:$0x1]
    %v175 = vld [vmem:[%s5] sm:$0x1]
    %176 = vmatprep.subr.mxu0 0.0
    %177 = vmatpush1.msra.mxu0 %v173
    %178 = vmatprep.subr.mxu0 0.0
    %179 = vmatpush1.msra.mxu0 %v172
    %180 = vmatprep.subr.mxu0 0.0
    %181 = vmatpush1.msra.mxu0 %v171
    %182 = vmatprep.subr.mxu0 0.0
    %183 = vmatpush1.msra.mxu0 %v170
    %184 = vmatprep.subr.mxu0 0.0
    %185 = vmatpush1.msra.mxu0 %v169
    %186 = vmatprep.subr.mxu0 0.0
    %187 = vmatpush1.msra.mxu0 %v168
    %188 = vmatprep.subr.mxu0 0.0
    %189 = vmatpush1.msra.mxu0 %v167
    %190 = vmatprep.subr.mxu0 0.0
    %191 = vmatpush1.msra.mxu0 %v166
    %192 = vmatprep.subr.mxu0 0.0
    %193 = vmatpush1.msra.mxu0 %v165
    %194 = vmatprep.subr.mxu0 0.0
    %195 = vmatpush1.msra.mxu0 %v164
    %196 = vmatprep.subr.mxu0 0.0
    %197 = vmatpush1.msra.mxu0 %v163
    %198 = vmatprep.subr.mxu0 0.0
    %199 = vmatpush1.msra.mxu0 %v162
    %200 = vmatprep.subr.mxu0 0.0
    %201 = vmatpush1.msra.mxu0 %v161
    %202 = vmatprep.subr.mxu0 0.0
    %203 = vmatpush1.msra.mxu0 %v160
    %204 = vmatprep.subr.mxu0 0.0
    %205 = vmatpush1.msra.mxu0 %v159
    %206 = vmatprep.subr.mxu0 0.0
    %207 = vmatpush1.msra.mxu0 %v158
    %208 = vmatprep.subr.mxu0 0.0
    %209 = vmatpush2.msra.mxu0 0.0
    %210 = vmatprep.subr.mxu0 0.0
    %211 = vmatpush2.msra.mxu0 0.0
    %212 = vmatprep.subr.mxu0 0.0
    %213 = vmatpush2.msra.mxu0 0.0
    %214 = vmatprep.subr.mxu0 0.0
    %215 = vmatpush2.msra.mxu0 0.0
    %216 = vmatprep.subr.mxu0 0.0
    %217 = vmatpush2.msra.mxu0 0.0
    %218 = vmatprep.subr.mxu0 0.0
    %219 = vmatpush2.msra.mxu0 0.0
    %220 = vmatprep.subr.mxu0 0.0
    %221 = vmatpush2.msra.mxu0 0.0
    %222 = vmatprep.subr.mxu0 0.0
    %223 = vmatpush2.msra.mxu0 0.0
    %224 = vmatprep.subr.mxu0 0.0
    %225 = vmatpush2.msra.mxu0 0.0
    %226 = vmatprep.subr.mxu0 0.0
    %227 = vmatpush2.msra.mxu0 0.0
    %228 = vmatprep.subr.mxu0 0.0
    %229 = vmatpush2.msra.mxu0 0.0
    %230 = vmatprep.subr.mxu0 0.0
    %231 = vmatpush2.msra.mxu0 0.0
    %232 = vmatprep.subr.mxu0 0.0
    %233 = vmatpush2.msra.mxu0 0.0
    %234 = vmatprep.subr.mxu0 0.0
    %235 = vmatpush2.msra.mxu0 0.0
    %236 = vmatprep.subr.mxu0 0.0
    %237 = vmatpush2.msra.mxu0 0.0
    %238 = vmatprep.subr.mxu0 0.0
    %239 = vmatpush2.msra.mxu0 0.0
    %240 = vmatprep.mubr.f32.mxu0 0.0
    %241 = vmatmul.mubr.f32.gmra.mxu0 %v157
    %v242 = vpop.f32.mrf.mxu0
    %v243 = vadd.f32 0.0, %v242
    %v244 = vpop.f32.mrf.mxu0
    %245 = vdwg.mxu0
    %v246 = vrot.slane %v243, 4
    %v247 = vadd.f32 %v243, %v246
    %v248 = vrot.slane %v247, 2
    %v249 = vadd.f32 %v247, %v248
    %v250 = vrot.slane %v249, 1
    %v251 = vadd.f32 %v249, %v250
    %v252 = vrcp.pop 8.0
    %v253 = vmul.f32 %v251, %v252
    %v254 = vsub.f32 %v243, %v253
    %v255 = vmul.f32 %v254, %v254
    %v256 = vrot.slane %v255, 4
    %v257 = vadd.f32 %v255, %v256
    %v258 = vrot.slane %v257, 2
    %v259 = vadd.f32 %v257, %v258
    %v260 = vrot.slane %v259, 1
    %v261 = vadd.f32 %v259, %v260
    %v262 = vmul.f32 %v261, %v252
    %v263 = vadd.f32 %v262, 1e-05
    %v264 = vrsqrt.pop %v263
    %v265 = vmul.f32 %v254, %v264
    %v267 = vlaneseq
    %v268 = vshrl.u32 %v267, 7
    %v269 = vsub.s32 0, %v268
    %v270 = vrot.slane %v174, %v269
    %v272 = vmul.f32 %v265, %v270
    %v274 = vlaneseq
    %v275 = vshrl.u32 %v274, 7
    %v276 = vsub.s32 0, %v275
    %v277 = vrot.slane %v175, %v276
    %v279 = vadd.f32 %v272, %v277
    %v280 = vmax.f32 %v279, 0.0
    %v281 = vld [vmem:[#allocation7] sm:$0xff]
    %v282 = vld [vmem:[#allocation7 + $0x8] sm:$0xff]
    %v283 = vld [vmem:[#allocation7 + $0x10] sm:$0xff]
    %v284 = vld [vmem:[#allocation7 + $0x18] sm:$0xff]
    %v285 = vld [vmem:[#allocation7 + $0x20] sm:$0xff]
    %v286 = vld [vmem:[#allocation7 + $0x28] sm:$0xff]
    %v287 = vld [vmem:[#allocation7 + $0x30] sm:$0xff]
    %v288 = vld [vmem:[#allocation7 + $0x38] sm:$0xff]
    %v289 = vld [vmem:[#allocation7 + $0x40] sm:$0xff]
    %v290 = vld [vmem:[#allocation7 + $0x48] sm:$0xff]
    %v291 = vld [vmem:[#allocation7 + $0x50] sm:$0xff]
    %v292 = vld [vmem:[#allocation7 + $0x58] sm:$0xff]
    %v293 = vld [vmem:[#allocation7 + $0x60] sm:$0xff]
    %v294 = vld [vmem:[#allocation7 + $0x68] sm:$0xff]
    %v295 = vld [vmem:[#allocation7 + $0x70] sm:$0xff]
    %v296 = vld [vmem:[#allocation7 + $0x78] sm:$0xff]
    %v297 = vld [vmem:[%s7] sm:$0x1]
    %v299 = vlaneseq
    %v300 = vshrl.u32 %v299, 7
    %v301 = vsub.s32 0, %v300
    %v302 = vrot.slane %v297, %v301
    %304 = vmatprep.subr.mxu0 0.0
    %305 = vmatpush1.msra.mxu0 %v296
    %306 = vmatprep.subr.mxu0 0.0
    %307 = vmatpush1.msra.mxu0 %v295
    %308 = vmatprep.subr.mxu0 0.0
    %309 = vmatpush1.msra.mxu0 %v294
    %310 = vmatprep.subr.mxu0 0.0
    %311 = vmatpush1.msra.mxu0 %v293
    %312 = vmatprep.subr.mxu0 0.0
    %313 = vmatpush1.msra.mxu0 %v292
    %314 = vmatprep.subr.mxu0 0.0
    %315 = vmatpush1.msra.mxu0 %v291
    %316 = vmatprep.subr.mxu0 0.0
    %317 = vmatpush1.msra.mxu0 %v290
    %318 = vmatprep.subr.mxu0 0.0
    %319 = vmatpush1.msra.mxu0 %v289
    %320 = vmatprep.subr.mxu0 0.0
    %321 = vmatpush1.msra.mxu0 %v288
    %322 = vmatprep.subr.mxu0 0.0
    %323 = vmatpush1.msra.mxu0 %v287
    %324 = vmatprep.subr.mxu0 0.0
    %325 = vmatpush1.msra.mxu0 %v286
    %326 = vmatprep.subr.mxu0 0.0
    %327 = vmatpush1.msra.mxu0 %v285
    %328 = vmatprep.subr.mxu0 0.0
    %329 = vmatpush1.msra.mxu0 %v284
    %330 = vmatprep.subr.mxu0 0.0
    %331 = vmatpush1.msra.mxu0 %v283
    %332 = vmatprep.subr.mxu0 0.0
    %333 = vmatpush1.msra.mxu0 %v282
    %334 = vmatprep.subr.mxu0 0.0
    %335 = vmatpush1.msra.mxu0 %v281
    %336 = vmatprep.subr.mxu0 0.0
    %337 = vmatpush2.msra.mxu0 0.0
    %338 = vmatprep.subr.mxu0 0.0
    %339 = vmatpush2.msra.mxu0 0.0
    %340 = vmatprep.subr.mxu0 0.0
    %341 = vmatpush2.msra.mxu0 0.0
    %342 = vmatprep.subr.mxu0 0.0
    %343 = vmatpush2.msra.mxu0 0.0
    %344 = vmatprep.subr.mxu0 0.0
    %345 = vmatpush2.msra.mxu0 0.0
    %346 = vmatprep.subr.mxu0 0.0
    %347 = vmatpush2.msra.mxu0 0.0
    %348 = vmatprep.subr.mxu0 0.0
    %349 = vmatpush2.msra.mxu0 0.0
    %350 = vmatprep.subr.mxu0 0.0
    %351 = vmatpush2.msra.mxu0 0.0
    %352 = vmatprep.subr.mxu0 0.0
    %353 = vmatpush2.msra.mxu0 0.0
    %354 = vmatprep.subr.mxu0 0.0
    %355 = vmatpush2.msra.mxu0 0.0
    %356 = vmatprep.subr.mxu0 0.0
    %357 = vmatpush2.msra.mxu0 0.0
    %358 = vmatprep.subr.mxu0 0.0
    %359 = vmatpush2.msra.mxu0 0.0
    %360 = vmatprep.subr.mxu0 0.0
    %361 = vmatpush2.msra.mxu0 0.0
    %362 = vmatprep.subr.mxu0 0.0
    %363 = vmatpush2.msra.mxu0 0.0
    %364 = vmatprep.subr.mxu0 0.0
    %365 = vmatpush2.msra.mxu0 0.0
    %366 = vmatprep.subr.mxu0 0.0
    %367 = vmatpush2.msra.mxu0 0.0
    %368 = vmatprep.mubr.f32.mxu0 0.0
    %369 = vmatmul.mubr.f32.gmra.mxu0 %v280
    %v370 = vpop.f32.mrf.mxu0
    %v371 = vadd.f32 %v302, %v370
    %v372 = vpop.f32.mrf.mxu0
    %373 = vdwg.mxu0
    %374 = vst [vmem:[#allocation8] sm:$0xff] %v371
    // Predicated region
    $region46: #{fwd.1} parent=1 // pred_check
      _
    $region47: #{fwd.1} parent=1 // pred_check_branch
      %376 = sbr.rel (0) target = $region49
    $region48: #{fwd.1} parent=1 // pred_region
      %s378 = ssub.s32 128, 128
      %379 = vsyncadd [#allocation4], %s378
      %s381 = sshll.u32 [#allocation8], 4
      %s382 = int_to_ptr.vmem [resolvable:$true] %s381
      %384 = dma.vmem_to_hbm [thread:$0]  %s382, 128, %s8, [#allocation4]
    $region49: #{fwd.1} parent=1 // pred_fallthru
      _
    // Predicated region
    $region50: #{fwd.1} parent=1 // pred_check
      _
    $region51: #{fwd.1} parent=1 // pred_check_branch
      %386 = sbr.rel (0) target = $region53
    $region52: #{fwd.1} parent=1 // pred_region
      %387 = dma.done [#allocation4], 128
    $region53: #{fwd.1} parent=1 // pred_fallthru
      _
    %388 = vsyncpa [#allocation3], 1
    %389 = vsyncpa [#allocation6], 1
    %390 = vsyncpa [#allocation4], 1

</llo_original>
